<compile_context>
chip_gen: v7x
topology: tpu7x:2x2x1
jax: 0.10.0
libtpu: 0.0.40
codegen_flags: <defaults>
</compile_context>

<pallas_src>
import jax
import jax.numpy as jnp
from jax.experimental import pallas as pl
from jax.experimental.pallas import tpu as pltpu

STATE_SPACE_SIZE = 12
HIDDEN_SIZE = 13 * STATE_SPACE_SIZE          # 156 (logical)
ACTION_SPACE_SIZE = 4                        # logical output width

HIDDEN_PADDED = 256                          # 2 full vregs of lanes
OUT_MXU = 128                                # lane-dense N for the 2nd matmul
OUT_STORE = 8                                # narrow output actually written to HBM


def _round_up(n, m):
    return ((n + m - 1) // m) * m


def _mlp_kernel(x_ref, w1_ref, b1_ref, w2_ref, b2_ref, o_ref):
    """One batch tile: x @ W1 + b1 -> ReLU -> @ W2 + b2; only 8 lanes stored."""
    x = x_ref[...].astype(w1_ref.dtype)                               # [tb, 12]
    h = jnp.dot(x, w1_ref[...], preferred_element_type=jnp.float32)   # [tb, 256] f32
    h = jnp.maximum(h + b1_ref[...], 0.0)                             # bias + ReLU
    y = jnp.dot(h.astype(w2_ref.dtype), w2_ref[...],
                preferred_element_type=jnp.float32)                   # [tb, 128] f32
    # Store only the first 8 lanes (logical 4 + padding); bias is 8-wide.
    o_ref[...] = (y[:, :OUT_STORE] + b2_ref[...]).astype(o_ref.dtype)


def _pad_params(w1, b1, w2, b2, param_dtype):
    """Zero-pad params to lane-dense shapes (zeros -> identical results)."""
    w1p = jnp.pad(w1, ((0, 0), (0, HIDDEN_PADDED - HIDDEN_SIZE))).astype(param_dtype)
    b1p = jnp.pad(b1, ((0, 0), (0, HIDDEN_PADDED - HIDDEN_SIZE)))     # f32 (added to acc)
    w2p = jnp.pad(w2, ((0, HIDDEN_PADDED - HIDDEN_SIZE),
                       (0, OUT_MXU - ACTION_SPACE_SIZE))).astype(param_dtype)
    b2p = jnp.pad(b2, ((0, 0), (0, OUT_STORE - ACTION_SPACE_SIZE)))   # f32, 8 wide
    return w1p, b1p, w2p, b2p


def neural_network_forward(x, w1, b1, w2, b2, *, tile_b=4096,
                           param_dtype=jnp.float32):
    """x: [B, 12] f32; w1: [12, 156]; b1: [1, 156]; w2: [156, 4]; b2: [1, 4].

    Returns [B, 4] f32.  Works for any B; the ragged last batch tile is handled
    by Pallas (masked output writeback), so no wrapper-side padding of x.
    """
    batch = x.shape[0]

    # Small batches get a single tile rounded to a sublane multiple; large
    # batches stream tile_b-row tiles (hidden activation is tile_b KiB of VMEM,
    # so 4096 rows ~ 4 MiB of staging - fine even on v7x's 64 MiB / 32 MiB scoped).
    tile_b = int(min(tile_b, _round_up(batch, 8)))
    n_tiles = pl.cdiv(batch, tile_b)
    grid = (n_tiles,)

    w1p, b1p, w2p, b2p = _pad_params(w1, b1, w2, b2, param_dtype)

    rows = n_tiles * tile_b
    flops = 2 * rows * (STATE_SPACE_SIZE * HIDDEN_PADDED + HIDDEN_PADDED * OUT_MXU)
    bytes_accessed = (
        batch * STATE_SPACE_SIZE * x.dtype.itemsize        # x in
        + batch * OUT_STORE * 4                             # y out (narrow)
        + STATE_SPACE_SIZE * HIDDEN_PADDED * w1p.dtype.itemsize
        + HIDDEN_PADDED * 4
        + HIDDEN_PADDED * OUT_MXU * w2p.dtype.itemsize
        + OUT_STORE * 4
    )

    out8 = pl.pallas_call(
        _mlp_kernel,
        out_shape=jax.ShapeDtypeStruct((batch, OUT_STORE), jnp.float32),
        grid=grid,
        in_specs=[
            # x tile streams with the grid (double-buffered by Pallas).
            pl.BlockSpec((tile_b, STATE_SPACE_SIZE), lambda i: (i, 0)),
            # Weights / biases: same block every step -> stay VMEM-resident.
            pl.BlockSpec((STATE_SPACE_SIZE, HIDDEN_PADDED), lambda i: (0, 0)),
            pl.BlockSpec((1, HIDDEN_PADDED), lambda i: (0, 0)),
            pl.BlockSpec((HIDDEN_PADDED, OUT_MXU), lambda i: (0, 0)),
            pl.BlockSpec((1, OUT_STORE), lambda i: (0, 0)),
        ],
        out_specs=pl.BlockSpec((tile_b, OUT_STORE), lambda i: (i, 0)),
        compiler_params=pltpu.CompilerParams(
            dimension_semantics=("parallel",),
            vmem_limit_bytes=32 * 1024 * 1024),
        cost_estimate=pl.CostEstimate(
            flops=flops, transcendentals=0, bytes_accessed=bytes_accessed),
    )(x, w1p, b1p, w2p, b2p)

    # Trivial 8 -> 4 lane slice (negligible traffic vs. the old 128-lane slab).
    return out8[:, :ACTION_SPACE_SIZE]


def init_params(key):
    """Deterministic init mimicking nn.Linear's uniform(-1/sqrt(fan_in), +)."""
    k1, k2, k3, k4 = jax.random.split(key, 4)

    bound1 = 1.0 / jnp.sqrt(jnp.float32(STATE_SPACE_SIZE))
    # stored as [in, out] (transposed vs torch's [out, in])
    w1 = jax.random.uniform(k1, (STATE_SPACE_SIZE, HIDDEN_SIZE),
                            jnp.float32, -bound1, bound1)
    b1 = jax.random.uniform(k2, (1, HIDDEN_SIZE), jnp.float32, -bound1, bound1)

    bound2 = 1.0 / jnp.sqrt(jnp.float32(HIDDEN_SIZE))
    w2 = jax.random.uniform(k3, (HIDDEN_SIZE, ACTION_SPACE_SIZE),
                            jnp.float32, -bound2, bound2)
    b2 = jax.random.uniform(k4, (1, ACTION_SPACE_SIZE), jnp.float32, -bound2, bound2)
    return w1, b1, w2, b2


def _reference_forward(x, w1, b1, w2, b2):
    h = jnp.maximum(x @ w1 + b1, 0.0)
    return h @ w2 + b2


if __name__ == "__main__":
    key = jax.random.PRNGKey(0)
    k_params, k_x, k_x2 = jax.random.split(key, 3)

    w1, b1, w2, b2 = init_params(k_params)

    # Small shape consistent with the module (12 -> 156 -> 4), f32 path.
    batch = 8
    x = jax.random.normal(k_x, (batch, STATE_SPACE_SIZE), jnp.float32)

    out = jax.block_until_ready(neural_network_forward(x, w1, b1, w2, b2))
    ref = _reference_forward(x, w1, b1, w2, b2)
    assert out.shape == (batch, ACTION_SPACE_SIZE)
    assert jnp.allclose(out, ref, atol=1e-5, rtol=1e-5)

    # Multi-tile, ragged-batch path (grid of 3 with a partial last tile), f32.
    batch2 = 1037
    x2 = jax.random.normal(k_x2, (batch2, STATE_SPACE_SIZE), jnp.float32)
    out2 = jax.block_until_ready(
        neural_network_forward(x2, w1, b1, w2, b2, tile_b=512))
    ref2 = _reference_forward(x2, w1, b1, w2, b2)
    assert out2.shape == (batch2, ACTION_SPACE_SIZE)
    assert jnp.allclose(out2, ref2, atol=1e-5, rtol=1e-5)

    # Optional bf16-operand path (f32 accumulation) - loose tolerance.
    out3 = jax.block_until_ready(
        neural_network_forward(x2, w1, b1, w2, b2, tile_b=512,
                               param_dtype=jnp.bfloat16))
    assert out3.shape == (batch2, ACTION_SPACE_SIZE)
    assert jnp.allclose(out3, ref2, atol=5e-2, rtol=5e-2)

    print("KERNEL_OK")
</pallas_src>

<mosaic_0001>
module attributes {stable_mosaic.version = 11 : i64} {
  func.func @_mlp_kernel(%arg0: i32, %arg1: memref<8x12xf32, #tpu.memory_space<vmem>>, %arg2: memref<12x256xf32, #tpu.memory_space<vmem>>, %arg3: memref<1x256xf32, #tpu.memory_space<vmem>>, %arg4: memref<256x128xf32, #tpu.memory_space<vmem>>, %arg5: memref<1x8xf32, #tpu.memory_space<vmem>>, %arg6: memref<8x8xf32, #tpu.memory_space<vmem>>) attributes {dimension_semantics = [#tpu.dimension_semantics<parallel>], iteration_bounds = array<i64: 1>, scalar_prefetch = 0 : i64, scratch_operands = 0 : i64, tpu.core_type = #tpu.core_type<tc>, window_params = [{transform_indices = @transform_0, window_bounds = array<i64: 8, 12>}, {pipeline_mode = #tpu.pipeline_mode<synchronous>, transform_indices = @transform_1, window_bounds = array<i64: 12, 256>}, {pipeline_mode = #tpu.pipeline_mode<synchronous>, transform_indices = @transform_2, window_bounds = array<i64: 1, 256>}, {pipeline_mode = #tpu.pipeline_mode<synchronous>, transform_indices = @transform_3, window_bounds = array<i64: 256, 128>}, {pipeline_mode = #tpu.pipeline_mode<synchronous>, transform_indices = @transform_4, window_bounds = array<i64: 1, 8>}, {transform_indices = @transform_5, window_bounds = array<i64: 8, 8>}]} {
    %c0 = arith.constant 0 : index
    %c0_0 = arith.constant 0 : index
    %0 = vector.load %arg1[%c0, %c0_0] : memref<8x12xf32, #tpu.memory_space<vmem>>, vector<8x12xf32>
    %c0_1 = arith.constant 0 : index
    %c0_2 = arith.constant 0 : index
    %1 = vector.load %arg2[%c0_1, %c0_2] : memref<12x256xf32, #tpu.memory_space<vmem>>, vector<12x256xf32>
    %cst = arith.constant dense<0.000000e+00> : vector<8x256xf32>
    %2 = tpu.matmul %0, %1, %cst {dimension_numbers = #tpu.dot_dimension_numbers<[1], [0], [0], [1], [0, 0, 1, 1], [], []>} : vector<8x12xf32>, vector<12x256xf32>, vector<8x256xf32> -> vector<8x256xf32>
    %c0_3 = arith.constant 0 : index
    %c0_4 = arith.constant 0 : index
    %3 = vector.load %arg3[%c0_3, %c0_4] : memref<1x256xf32, #tpu.memory_space<vmem>>, vector<1x256xf32>
    %4 = vector.broadcast %3 : vector<1x256xf32> to vector<8x256xf32>
    %5 = arith.addf %2, %4 : vector<8x256xf32>
    %cst_5 = arith.constant 0.000000e+00 : f32
    %6 = vector.broadcast %cst_5 : f32 to vector<8x256xf32>
    %7 = arith.maximumf %5, %6 : vector<8x256xf32>
    %c0_6 = arith.constant 0 : index
    %c0_7 = arith.constant 0 : index
    %8 = vector.load %arg4[%c0_6, %c0_7] : memref<256x128xf32, #tpu.memory_space<vmem>>, vector<256x128xf32>
    %cst_8 = arith.constant dense<0.000000e+00> : vector<8x128xf32>
    %9 = tpu.matmul %7, %8, %cst_8 {dimension_numbers = #tpu.dot_dimension_numbers<[1], [0], [0], [1], [0, 0, 1, 1], [], []>} : vector<8x256xf32>, vector<256x128xf32>, vector<8x128xf32> -> vector<8x128xf32>
    %10 = vector.extract_strided_slice %9 {offsets = [0, 0], sizes = [8, 8], strides = [1, 1]} : vector<8x128xf32> to vector<8x8xf32>
    %c0_9 = arith.constant 0 : index
    %c0_10 = arith.constant 0 : index
    %11 = vector.load %arg5[%c0_9, %c0_10] : memref<1x8xf32, #tpu.memory_space<vmem>>, vector<1x8xf32>
    %12 = vector.broadcast %11 : vector<1x8xf32> to vector<8x8xf32>
    %13 = arith.addf %10, %12 : vector<8x8xf32>
    %c0_11 = arith.constant 0 : index
    %c0_12 = arith.constant 0 : index
    %14 = vector.load %arg6[%c0_11, %c0_12] : memref<8x8xf32, #tpu.memory_space<vmem>>, vector<8x8xf32>
    tpu.vector_store %arg6[%c0_11, %c0_12], %13 {strides = array<i32>} : memref<8x8xf32, #tpu.memory_space<vmem>>, vector<8x8xf32>,
    return
  }
  func.func @transform_0(%arg0: i32) -> (i32, i32) {
    %c0_i32 = arith.constant 0 : i32
    %c0_i32_0 = arith.constant 0 : i32
    return %arg0, %c0_i32 : i32, i32
  }
  func.func @transform_1(%arg0: i32) -> (i32, i32) {
    %c0_i32 = arith.constant 0 : i32
    %c0_i32_0 = arith.constant 0 : i32
    %c0_i32_1 = arith.constant 0 : i32
    return %c0_i32, %c0_i32_0 : i32, i32
  }
  func.func @transform_2(%arg0: i32) -> (i32, i32) {
    %c0_i32 = arith.constant 0 : i32
    %c0_i32_0 = arith.constant 0 : i32
    %c0_i32_1 = arith.constant 0 : i32
    return %c0_i32, %c0_i32_0 : i32, i32
  }
  func.func @transform_3(%arg0: i32) -> (i32, i32) {
    %c0_i32 = arith.constant 0 : i32
    %c0_i32_0 = arith.constant 0 : i32
    %c0_i32_1 = arith.constant 0 : i32
    return %c0_i32, %c0_i32_0 : i32, i32
  }
  func.func @transform_4(%arg0: i32) -> (i32, i32) {
    %c0_i32 = arith.constant 0 : i32
    %c0_i32_0 = arith.constant 0 : i32
    %c0_i32_1 = arith.constant 0 : i32
    return %c0_i32, %c0_i32_0 : i32, i32
  }
  func.func @transform_5(%arg0: i32) -> (i32, i32) {
    %c0_i32 = arith.constant 0 : i32
    %c0_i32_0 = arith.constant 0 : i32
    return %arg0, %c0_i32 : i32, i32
  }
}

</mosaic_0001>

<llo_original>
// kernel: tpu_custom_call.1
$region0: #{tpu_custom_call.1}
  #allocation0 [shape = 'u32[]', space=smem, size = 0x4, offset = 0x4, fixed_abs, tag = 'smem constant byte address 0x4 - core index']
  #allocation1 [shape = 'u32[144,128]{1,0:T(1,128)}', space=vmem, size = 0x12000, scoped, tag = 'internal scratch']
  %s0 = inlined_call_operand.hbm [shape: f32[8,12], index: 0, kind: input, shape index: {}]
  %s1 = inlined_call_operand.hbm [shape: f32[12,256], index: 1, kind: input, shape index: {}]
  %s2 = inlined_call_operand.vmem [shape: f32[1,256], index: 2, kind: input, shape index: {}]
  %s3 = inlined_call_operand.hbm [shape: f32[256,128], index: 3, kind: input, shape index: {}]
  %s4 = inlined_call_operand.vmem [shape: f32[1,8], index: 4, kind: input, shape index: {}]
  %s5 = inlined_call_operand.hbm [shape: f32[8,8], index: 5, kind: output, shape index: {}]
  %s6 = sld [smem:[#allocation0]]
  $region42: #{tpu_custom_call.1} parent=0
    _
  %s8 = ssub.s32 1, %s6
  %s9 = scalar_select 0, %s8, %s6
  $region1: #{tpu_custom_call.1} parent=0
    #allocation2 [shape = 'u8[4096]{0}', space=vmem, size = 0x1000, scoped, tag = 'input window, operand 0, single buffered']
    #allocation3 [shape = 's32[1]{0}', space=sflag, size = 0x4, scoped, tag = 'scoped memory for tpu_custom_call.1']
    #allocation4 [shape = 's32[1]{0}', space=sflag, size = 0x4, scoped, tag = 'scoped memory for tpu_custom_call.1']
    #allocation5 [shape = 'u8[16384]{0}', space=vmem, size = 0x4000, scoped, tag = 'input window, operand 1, single buffered']
    #allocation6 [shape = 's32[1]{0}', space=sflag, size = 0x4, scoped, tag = 'scoped memory for tpu_custom_call.1']
    #allocation7 [shape = 'u8[131072]{0}', space=vmem, size = 0x20000, scoped, tag = 'input window, operand 3, single buffered']
    #allocation8 [shape = 'u8[4096]{0}', space=vmem, size = 0x1000, scoped, tag = 'output window, operand 0, single buffered']
    %10 = vsyncpa [#allocation3], 0
    %11 = vsyncpa [#allocation6], 0
    %12 = vsyncpa [#allocation4], 0
    // Predicated region
    $region2: #{tpu_custom_call.1} parent=1 // pred_check
      _
    $region3: #{tpu_custom_call.1} parent=1 // pred_check_branch
      %14 = sbr.rel (0) target = $region5
    $region4: #{tpu_custom_call.1} parent=1 // pred_region
      %s16 = ssub.s32 128, 128
      %17 = vsyncadd [#allocation3], %s16
      %s19 = sshll.u32 [#allocation2], 4
      %s20 = int_to_ptr.vmem [resolvable:$true] %s19
      %22 = dma.hbm_to_vmem [thread:$0]  %s0, 128, %s20, [#allocation3]
    $region5: #{tpu_custom_call.1} parent=1 // pred_fallthru
      _
    // Predicated region
    $region6: #{tpu_custom_call.1} parent=1 // pred_check
      _
    $region7: #{tpu_custom_call.1} parent=1 // pred_check_branch
      %24 = sbr.rel (0) target = $region9
    $region8: #{tpu_custom_call.1} parent=1 // pred_region
      %s26 = ssub.s32 512, 512
      %27 = vsyncadd [#allocation6], %s26
      %s28 = sshll.u32 [#allocation5], 4
      %s29 = int_to_ptr.vmem [resolvable:$true] %s28
      %34 = dma.hbm_to_vmem [thread:$0]  %s1, 512, %s29, [#allocation6], 256, 256, 16
    $region9: #{tpu_custom_call.1} parent=1 // pred_fallthru
      _
    // Predicated region
    $region10: #{tpu_custom_call.1} parent=1 // pred_check
      _
    $region11: #{tpu_custom_call.1} parent=1 // pred_check_branch
      %36 = sbr.rel (0) target = $region13
    $region12: #{tpu_custom_call.1} parent=1 // pred_region
      _
    $region13: #{tpu_custom_call.1} parent=1 // pred_fallthru
      _
    // Predicated region
    $region14: #{tpu_custom_call.1} parent=1 // pred_check
      _
    $region15: #{tpu_custom_call.1} parent=1 // pred_check_branch
      %38 = sbr.rel (0) target = $region17
    $region16: #{tpu_custom_call.1} parent=1 // pred_region
      %s40 = ssub.s32 4096, 4096
      %41 = vsyncadd [#allocation6], %s40
      %s42 = sshll.u32 [#allocation7], 4
      %s43 = int_to_ptr.vmem [resolvable:$true] %s42
      %48 = dma.hbm_to_vmem [thread:$0]  %s3, 4096, %s43, [#allocation6], 128, 128, 8
    $region17: #{tpu_custom_call.1} parent=1 // pred_fallthru
      _
    // Predicated region
    $region18: #{tpu_custom_call.1} parent=1 // pred_check
      _
    $region19: #{tpu_custom_call.1} parent=1 // pred_check_branch
      %50 = sbr.rel (0) target = $region21
    $region20: #{tpu_custom_call.1} parent=1 // pred_region
      _
    $region21: #{tpu_custom_call.1} parent=1 // pred_fallthru
      _
    // Predicated region
    $region22: #{tpu_custom_call.1} parent=1 // pred_check
      _
    $region23: #{tpu_custom_call.1} parent=1 // pred_check_branch
      %52 = sbr.rel (0) target = $region25
    $region24: #{tpu_custom_call.1} parent=1 // pred_region
      %53 = dma.done [#allocation3], 128
    $region25: #{tpu_custom_call.1} parent=1 // pred_fallthru
      _
    // Predicated region
    $region26: #{tpu_custom_call.1} parent=1 // pred_check
      _
    $region27: #{tpu_custom_call.1} parent=1 // pred_check_branch
      %55 = sbr.rel (0) target = $region29
    $region28: #{tpu_custom_call.1} parent=1 // pred_region
      %56 = dma.done [#allocation6], 512
    $region29: #{tpu_custom_call.1} parent=1 // pred_fallthru
      _
    // Predicated region
    $region30: #{tpu_custom_call.1} parent=1 // pred_check
      _
    $region31: #{tpu_custom_call.1} parent=1 // pred_check_branch
      %58 = sbr.rel (0) target = $region33
    $region32: #{tpu_custom_call.1} parent=1 // pred_region
      %59 = dma.done [#allocation6], 4096
    $region33: #{tpu_custom_call.1} parent=1 // pred_fallthru
      _
    %v60 = vld [vmem:[#allocation2] sm:$0xff]
    %v61 = vld [vmem:[#allocation5] sm:$0xff]
    %v62 = vld [vmem:[#allocation5 + $0x8] sm:$0xff]
    %v63 = vld [vmem:[#allocation5 + $0x10] sm:$0xf]
    %v64 = vld [vmem:[#allocation5 + $0x18] sm:$0xf]
    %v65 = vld [vmem:[%s2] sm:$0x3]
    %v67 = vlaneseq
    %v68 = vshrl.u32 %v67, 7
    %v69 = vsub.s32 0, %v68
    %v70 = vrot.slane %v65, %v69
    %v71 = vlaneseq
    %v72 = vshrl.u32 %v71, 7
    %v73 = vsub.s32 1, %v72
    %v74 = vrot.slane %v65, %v73
    %vm77 = vcmask 97280
    %v79 = vsel %vm77, %v60, 0
    %vm81 = vcmask 1043456
    %v83 = vsel %vm81, %v63, 0
    %v86 = vsel %vm81, %v64, 0
    %88 = vmatprep.subr.mxu0 %v62
    %89 = vmatpush1.msra.mxu0 %v61
    %90 = vmatprep.subr.mxu0 %v86
    %91 = vmatpush1.msra.mxu0 %v83
    %92 = vmatprep.subr.mxu0 0.0
    %93 = vmatpush1.msra.mxu0 0.0
    %94 = vmatprep.subr.mxu0 0.0
    %95 = vmatpush1.msra.mxu0 0.0
    %96 = vmatprep.subr.mxu0 0.0
    %97 = vmatpush1.msra.mxu0 0.0
    %98 = vmatprep.subr.mxu0 0.0
    %99 = vmatpush1.msra.mxu0 0.0
    %100 = vmatprep.subr.mxu0 0.0
    %101 = vmatpush1.msra.mxu0 0.0
    %102 = vmatprep.subr.mxu0 0.0
    %103 = vmatpush1.msra.mxu0 0.0
    %104 = vmatprep.subr.mxu0 0.0
    %105 = vmatpush1.msra.mxu0 0.0
    %106 = vmatprep.subr.mxu0 0.0
    %107 = vmatpush1.msra.mxu0 0.0
    %108 = vmatprep.subr.mxu0 0.0
    %109 = vmatpush1.msra.mxu0 0.0
    %110 = vmatprep.subr.mxu0 0.0
    %111 = vmatpush1.msra.mxu0 0.0
    %112 = vmatprep.subr.mxu0 0.0
    %113 = vmatpush1.msra.mxu0 0.0
    %114 = vmatprep.subr.mxu0 0.0
    %115 = vmatpush1.msra.mxu0 0.0
    %116 = vmatprep.subr.mxu0 0.0
    %117 = vmatpush1.msra.mxu0 0.0
    %118 = vmatprep.subr.mxu0 0.0
    %119 = vmatpush1.msra.mxu0 0.0
    %120 = vmatprep.subr.mxu0 0.0
    %121 = vmatpush1.msra.mxu0 0.0
    %122 = vmatprep.subr.mxu0 0.0
    %123 = vmatpush1.msra.mxu0 0.0
    %124 = vmatprep.subr.mxu0 0.0
    %125 = vmatpush1.msra.mxu0 0.0
    %126 = vmatprep.subr.mxu0 0.0
    %127 = vmatpush1.msra.mxu0 0.0
    %128 = vmatprep.subr.mxu0 0.0
    %129 = vmatpush1.msra.mxu0 0.0
    %130 = vmatprep.subr.mxu0 0.0
    %131 = vmatpush1.msra.mxu0 0.0
    %132 = vmatprep.subr.mxu0 0.0
    %133 = vmatpush1.msra.mxu0 0.0
    %134 = vmatprep.subr.mxu0 0.0
    %135 = vmatpush1.msra.mxu0 0.0
    %136 = vmatprep.subr.mxu0 0.0
    %137 = vmatpush1.msra.mxu0 0.0
    %138 = vmatprep.subr.mxu0 0.0
    %139 = vmatpush1.msra.mxu0 0.0
    %140 = vmatprep.subr.mxu0 0.0
    %141 = vmatpush1.msra.mxu0 0.0
    %142 = vmatprep.subr.mxu0 0.0
    %143 = vmatpush1.msra.mxu0 0.0
    %144 = vmatprep.subr.mxu0 0.0
    %145 = vmatpush1.msra.mxu0 0.0
    %146 = vmatprep.subr.mxu0 0.0
    %147 = vmatpush1.msra.mxu0 0.0
    %148 = vmatprep.subr.mxu0 0.0
    %149 = vmatpush1.msra.mxu0 0.0
    %150 = vmatprep.subr.mxu0 0.0
    %151 = vmatpush1.msra.mxu0 0.0
    %152 = vmatprep.mubr.f32.mxu0 0.0
    %153 = vmatmul.mubr.f32.gmra.mrb[0].mxu0 %v79
    %v154 = vpop.f32.mrb[0].mxu0
    %v155 = vadd.f32 %v70, %v154
    %v156 = vpop.f32.mrb[0].mxu0
    %v157 = vadd.f32 %v74, %v156
    %158 = vdwg.mxu0
    %v159 = vmax.f32 %v155, 0.0
    %v160 = vmax.f32 %v157, 0.0
    %v161 = vld [vmem:[#allocation7] sm:$0xff]
    %v162 = vld [vmem:[#allocation7 + $0x8] sm:$0xff]
    %v163 = vld [vmem:[#allocation7 + $0x10] sm:$0xff]
    %v164 = vld [vmem:[#allocation7 + $0x18] sm:$0xff]
    %v165 = vld [vmem:[#allocation7 + $0x20] sm:$0xff]
    %v166 = vld [vmem:[#allocation7 + $0x28] sm:$0xff]
    %v167 = vld [vmem:[#allocation7 + $0x30] sm:$0xff]
    %v168 = vld [vmem:[#allocation7 + $0x38] sm:$0xff]
    %v169 = vld [vmem:[#allocation7 + $0x40] sm:$0xff]
    %v170 = vld [vmem:[#allocation7 + $0x48] sm:$0xff]
    %v171 = vld [vmem:[#allocation7 + $0x50] sm:$0xff]
    %v172 = vld [vmem:[#allocation7 + $0x58] sm:$0xff]
    %v173 = vld [vmem:[#allocation7 + $0x60] sm:$0xff]
    %v174 = vld [vmem:[#allocation7 + $0x68] sm:$0xff]
    %v175 = vld [vmem:[#allocation7 + $0x70] sm:$0xff]
    %v176 = vld [vmem:[#allocation7 + $0x78] sm:$0xff]
    %v177 = vld [vmem:[#allocation7 + $0x80] sm:$0xff]
    %v178 = vld [vmem:[#allocation7 + $0x88] sm:$0xff]
    %v179 = vld [vmem:[#allocation7 + $0x90] sm:$0xff]
    %v180 = vld [vmem:[#allocation7 + $0x98] sm:$0xff]
    %v181 = vld [vmem:[#allocation7 + $0xa0] sm:$0xff]
    %v182 = vld [vmem:[#allocation7 + $0xa8] sm:$0xff]
    %v183 = vld [vmem:[#allocation7 + $0xb0] sm:$0xff]
    %v184 = vld [vmem:[#allocation7 + $0xb8] sm:$0xff]
    %v185 = vld [vmem:[#allocation7 + $0xc0] sm:$0xff]
    %v186 = vld [vmem:[#allocation7 + $0xc8] sm:$0xff]
    %v187 = vld [vmem:[#allocation7 + $0xd0] sm:$0xff]
    %v188 = vld [vmem:[#allocation7 + $0xd8] sm:$0xff]
    %v189 = vld [vmem:[#allocation7 + $0xe0] sm:$0xff]
    %v190 = vld [vmem:[#allocation7 + $0xe8] sm:$0xff]
    %v191 = vld [vmem:[#allocation7 + $0xf0] sm:$0xff]
    %v192 = vld [vmem:[#allocation7 + $0xf8] sm:$0xff]
    %193 = vmatprep.subr.mxu0 0.0
    %194 = vmatpush1.msra.mxu0 %v161
    %195 = vmatprep.subr.mxu0 0.0
    %196 = vmatpush1.msra.mxu0 %v162
    %197 = vmatprep.subr.mxu0 0.0
    %198 = vmatpush1.msra.mxu0 %v163
    %199 = vmatprep.subr.mxu0 0.0
    %200 = vmatpush1.msra.mxu0 %v164
    %201 = vmatprep.subr.mxu0 0.0
    %202 = vmatpush1.msra.mxu0 %v165
    %203 = vmatprep.subr.mxu0 0.0
    %204 = vmatpush1.msra.mxu0 %v166
    %205 = vmatprep.subr.mxu0 0.0
    %206 = vmatpush1.msra.mxu0 %v167
    %207 = vmatprep.subr.mxu0 0.0
    %208 = vmatpush1.msra.mxu0 %v168
    %209 = vmatprep.subr.mxu0 0.0
    %210 = vmatpush1.msra.mxu0 %v169
    %211 = vmatprep.subr.mxu0 0.0
    %212 = vmatpush1.msra.mxu0 %v170
    %213 = vmatprep.subr.mxu0 0.0
    %214 = vmatpush1.msra.mxu0 %v171
    %215 = vmatprep.subr.mxu0 0.0
    %216 = vmatpush1.msra.mxu0 %v172
    %217 = vmatprep.subr.mxu0 0.0
    %218 = vmatpush1.msra.mxu0 %v173
    %219 = vmatprep.subr.mxu0 0.0
    %220 = vmatpush1.msra.mxu0 %v174
    %221 = vmatprep.subr.mxu0 0.0
    %222 = vmatpush1.msra.mxu0 %v175
    %223 = vmatprep.subr.mxu0 0.0
    %224 = vmatpush1.msra.mxu0 %v176
    %225 = vmatprep.subr.mxu0 0.0
    %226 = vmatpush1.msra.mxu0 %v177
    %227 = vmatprep.subr.mxu0 0.0
    %228 = vmatpush1.msra.mxu0 %v178
    %229 = vmatprep.subr.mxu0 0.0
    %230 = vmatpush1.msra.mxu0 %v179
    %231 = vmatprep.subr.mxu0 0.0
    %232 = vmatpush1.msra.mxu0 %v180
    %233 = vmatprep.subr.mxu0 0.0
    %234 = vmatpush1.msra.mxu0 %v181
    %235 = vmatprep.subr.mxu0 0.0
    %236 = vmatpush1.msra.mxu0 %v182
    %237 = vmatprep.subr.mxu0 0.0
    %238 = vmatpush1.msra.mxu0 %v183
    %239 = vmatprep.subr.mxu0 0.0
    %240 = vmatpush1.msra.mxu0 %v184
    %241 = vmatprep.subr.mxu0 0.0
    %242 = vmatpush1.msra.mxu0 %v185
    %243 = vmatprep.subr.mxu0 0.0
    %244 = vmatpush1.msra.mxu0 %v186
    %245 = vmatprep.subr.mxu0 0.0
    %246 = vmatpush1.msra.mxu0 %v187
    %247 = vmatprep.subr.mxu0 0.0
    %248 = vmatpush1.msra.mxu0 %v188
    %249 = vmatprep.subr.mxu0 0.0
    %250 = vmatpush1.msra.mxu0 %v189
    %251 = vmatprep.subr.mxu0 0.0
    %252 = vmatpush1.msra.mxu0 %v190
    %253 = vmatprep.subr.mxu0 0.0
    %254 = vmatpush1.msra.mxu0 %v191
    %255 = vmatprep.subr.mxu0 0.0
    %256 = vmatpush1.msra.mxu0 %v192
    %257 = vmatprep.mubr.f32.mxu0 %v160
    %258 = vmatmul.mubr.f32.gmra.mrb[0].mxu0 %v159
    %v259 = vpop.f32.mrb[0].mxu0
    %v260 = vadd.f32 0.0, %v259
    %v261 = vpop.f32.mrb[0].mxu0
    %262 = vdwg.mxu0
    %v263 = vld [vmem:[%s4] sm:$0x1]
    %v265 = vlaneseq
    %v266 = vshrl.u32 %v265, 7
    %v267 = vsub.s32 0, %v266
    %v268 = vrot.slane %v263, %v267
    %v270 = vadd.f32 %v260, %v268
    %vm271 = vcmask 64512
    %272 = vst.msk [vmem:[#allocation8] sm:$0xff] %vm271, %v270
    // Predicated region
    $region34: #{tpu_custom_call.1} parent=1 // pred_check
      _
    $region35: #{tpu_custom_call.1} parent=1 // pred_check_branch
      %274 = sbr.rel (0) target = $region37
    $region36: #{tpu_custom_call.1} parent=1 // pred_region
      %s276 = ssub.s32 128, 128
      %277 = vsyncadd [#allocation4], %s276
      %s279 = sshll.u32 [#allocation8], 4
      %s280 = int_to_ptr.vmem [resolvable:$true] %s279
      %282 = dma.vmem_to_hbm [thread:$0]  %s280, 128, %s5, [#allocation4]
    $region37: #{tpu_custom_call.1} parent=1 // pred_fallthru
      _
    // Predicated region
    $region38: #{tpu_custom_call.1} parent=1 // pred_check
      _
    $region39: #{tpu_custom_call.1} parent=1 // pred_check_branch
      %284 = sbr.rel (0) target = $region41
    $region40: #{tpu_custom_call.1} parent=1 // pred_region
      %285 = dma.done [#allocation4], 128
    $region41: #{tpu_custom_call.1} parent=1 // pred_fallthru
      _
    %286 = vsyncpa [#allocation3], 1
    %287 = vsyncpa [#allocation6], 1
    %288 = vsyncpa [#allocation4], 1

</llo_original>
